<compile_context>
chip_gen: v7x
topology: tpu7x:2x2x1
jax: 0.10.0
libtpu: 0.0.40
codegen_flags: <defaults>
</compile_context>

<pallas_src>
from functools import partial

import jax
import jax.numpy as jnp
from jax.experimental import pallas as pl
from jax.experimental.pallas import tpu as pltpu

LANE = 128


def _round_up(n, m):
    return ((n + m - 1) // m) * m


_HW_BUDGET = None


def _hw_budget():
    """(tm_max, tk_max, vmem_limit_bytes), tuned by VMEM capacity.
    v7x: 64 MiB -> conservative; v5e/v6e: 128 MiB -> bigger tiles, higher limit."""
    global _HW_BUDGET
    if _HW_BUDGET is None:
        cap = 64 * 1024 * 1024
        try:
            info = pltpu.get_tpu_info()
            cap = int(getattr(info, "vmem_capacity_bytes", cap) or cap)
        except Exception:
            pass
        tm_max = 512 if cap >= 100 * 1024 * 1024 else 256
        vmem_limit = int(min(cap * 3 // 4, 112 * 1024 * 1024))
        _HW_BUDGET = (tm_max, 2048, vmem_limit)
    return _HW_BUDGET


def _matmul_act_kernel(a_ref, b_ref, o_ref, acc_ref, *, activation, out_valid):
    """One (tm, out_p) output tile of act(A @ B); K is tiled along grid axis 1."""
    k = pl.program_id(1)

    @pl.when(k == 0)
    def _init():
        acc_ref[...] = jnp.zeros_like(acc_ref)

    acc_ref[...] += jnp.dot(a_ref[...], b_ref[...],
                            preferred_element_type=jnp.float32)

    @pl.when(k == pl.num_programs(1) - 1)
    def _finalize():
        h = acc_ref[...]
        if activation == "relu":
            h = jnp.maximum(h, 0.0)          # padded lanes are exactly 0 and stay 0
        elif activation == "softmax":        # softmax over dim=1 (feature axis)
            if out_valid < h.shape[1]:
                lane = jax.lax.broadcasted_iota(jnp.int32, h.shape, 1)
                h = jnp.where(lane < out_valid, h, -1e30)   # padded lanes -> exp()==0
            m = jnp.max(h, axis=1, keepdims=True)
            e = jnp.exp(h - m)
            h = e * pl.reciprocal(jnp.sum(e, axis=1, keepdims=True), approx=True)
        o_ref[...] = h.astype(o_ref.dtype)


def fused_matmul(a, b, *, activation=None, out_dtype=jnp.float32):
    """act(a @ b) with f32 MXU accumulation.  a: [M, K], b: [K, n_out].
    Pads M / K / n_out to tile multiples internally; returns [M, n_out]."""
    M, Ka = a.shape
    Kb, n_out = b.shape
    K = max(Ka, Kb)
    tm_max, tk_max, vmem_limit = _hw_budget()
    # Sublane alignment depends on dtype packing (f32: 8, bf16: 16, int8/fp8: 32).
    sub = {4: 8, 2: 16, 1: 32}.get(a.dtype.itemsize, 8)
    tm = min(tm_max, _round_up(M, sub))
    tk = min(tk_max, _round_up(K, LANE))
    m_pad = _round_up(M, tm)
    k_pad = _round_up(K, tk)
    out_p = _round_up(n_out, LANE)
    if (m_pad, k_pad) != (M, Ka):
        a = jnp.pad(a, ((0, m_pad - M), (0, k_pad - Ka)))
    if (k_pad, out_p) != (Kb, n_out):
        b = jnp.pad(b, ((0, k_pad - Kb), (0, out_p - n_out)))

    kernel = partial(_matmul_act_kernel, activation=activation, out_valid=n_out)
    out = pl.pallas_call(
        kernel,
        out_shape=jax.ShapeDtypeStruct((m_pad, out_p), out_dtype),
        grid_spec=pltpu.PrefetchScalarGridSpec(
            num_scalar_prefetch=0,
            grid=(m_pad // tm, k_pad // tk),        # reduction (K) axis last
            in_specs=[
                pl.BlockSpec((tm, tk), lambda i, k: (i, k)),     # adjacency tile
                pl.BlockSpec((tk, out_p), lambda i, k: (k, 0)),  # stacked XW tile
            ],
            out_specs=pl.BlockSpec((tm, out_p), lambda i, k: (i, 0)),
            scratch_shapes=[pltpu.VMEM((tm, out_p), jnp.float32)],
        ),
        compiler_params=pltpu.CompilerParams(
            dimension_semantics=("parallel", "arbitrary"),  # dst tiles shard across TCs
            vmem_limit_bytes=vmem_limit,
        ),
    )(a, b)
    return out[:M, :n_out]


def rgcn_forward(adj, weights, compute_dtype=jnp.bfloat16):
    """adj: [R, N, N] with adj[r, dst, src] = edge norm; weights[l]: [R, in_l, out_l]."""
    R, N, _ = adj.shape
    # Fold relations into the contraction dimension: A2[d, r*N + s] = A_r[d, s].
    a2 = jnp.transpose(adj, (1, 0, 2)).reshape(N, R * N).astype(compute_dtype)
    # TODO(synk): for large sparse graphs, replace this dense A2 with block-sparse
    # (dst-tile, k-tile) lists driven by PrefetchScalarGridSpec scalar-prefetch
    # index_maps so all-zero adjacency tiles are never DMA'd or multiplied.

    # Input layer: features are one-hot node ids, so X @ W_r == W_r -> stack W along K.
    b0 = weights[0].reshape(R * N, weights[0].shape[2]).astype(compute_dtype)
    h = fused_matmul(a2, b0, activation="relu", out_dtype=compute_dtype)

    # Hidden layers: feature transform hoisted out of the grid (once per layer).
    for w in weights[1:-1]:
        xw = jnp.einsum("sf,rfo->rso", h.astype(jnp.float32), w,
                        preferred_element_type=jnp.float32)
        xw = xw.reshape(R * N, w.shape[2]).astype(compute_dtype)
        h = fused_matmul(a2, xw, activation="relu", out_dtype=compute_dtype)

    # Output layer: softmax over the feature axis (dim=1), emitted in f32.
    w = weights[-1]
    xw = jnp.einsum("sf,rfo->rso", h.astype(jnp.float32), w,
                    preferred_element_type=jnp.float32)
    xw = xw.reshape(R * N, w.shape[2]).astype(compute_dtype)
    return fused_matmul(a2, xw, activation="softmax", out_dtype=jnp.float32)


def xavier_uniform(key, shape, gain):
    # Matches nn.init.xavier_uniform_ fan computation for a 3D (B, in, out) tensor.
    fan_in = shape[1] * shape[2]
    fan_out = shape[0] * shape[2]
    bound = gain * jnp.sqrt(6.0 / (fan_in + fan_out))
    return jax.random.uniform(key, shape, jnp.float32, -bound, bound)


if __name__ == "__main__":
    # Small, deterministic configuration consistent with RGCN.__init__
    num_nodes = 16
    h_dim = 32
    out_dim = 8
    num_rels = 4
    num_hidden_layers = 1
    num_edges = 64

    key = jax.random.PRNGKey(0)
    k_src, k_dst, k_rel, k_w1, k_w2, k_w3 = jax.random.split(key, 6)

    # Synthetic graph: edges (src -> dst) with relation type and in-degree norm.
    src = jax.random.randint(k_src, (num_edges,), 0, num_nodes)
    dst = jax.random.randint(k_dst, (num_edges,), 0, num_nodes)
    rel = jax.random.randint(k_rel, (num_edges,), 0, num_rels)
    deg = jnp.zeros((num_nodes,), jnp.float32).at[dst].add(1.0)
    norm = 1.0 / jnp.maximum(deg[dst], 1.0)
    adj = jnp.zeros((num_rels, num_nodes, num_nodes), jnp.float32).at[rel, dst, src].add(norm)

    # Layer weights (num_bases == -1 -> num_bases == num_rels, no w_comp mixing).
    gain = jnp.sqrt(2.0)  # calculate_gain('relu')
    w_in = xavier_uniform(k_w1, (num_rels, num_nodes, h_dim), gain)
    w_h = xavier_uniform(k_w2, (num_rels, h_dim, h_dim), gain)
    w_out = xavier_uniform(k_w3, (num_rels, h_dim, out_dim), gain)
    weights = [w_in] + [w_h] * num_hidden_layers + [w_out]
    # TODO(synk): if num_bases < num_rels, mix bases via w_comp with a plain-JAX einsum first.

    out = jax.jit(rgcn_forward)(adj, weights)
    out = jax.block_until_ready(out)

    # Pure-JAX reference mirroring the kernel's bf16 quantization of A2 / XW / h.
    dt = jnp.bfloat16
    K = num_rels * num_nodes
    a2_ref = jnp.transpose(adj, (1, 0, 2)).reshape(num_nodes, K).astype(dt).astype(jnp.float32)
    b0_ref = w_in.reshape(K, h_dim).astype(dt).astype(jnp.float32)
    h_ref = jnp.maximum(a2_ref @ b0_ref, 0.0).astype(dt).astype(jnp.float32)
    for w in weights[1:-1]:
        xw_ref = jnp.einsum("sf,rfo->rso", h_ref, w,
                            preferred_element_type=jnp.float32).reshape(K, -1)
        xw_ref = xw_ref.astype(dt).astype(jnp.float32)
        h_ref = jnp.maximum(a2_ref @ xw_ref, 0.0).astype(dt).astype(jnp.float32)
    xw_ref = jnp.einsum("sf,rfo->rso", h_ref, weights[-1],
                        preferred_element_type=jnp.float32).reshape(K, -1)
    xw_ref = xw_ref.astype(dt).astype(jnp.float32)
    ref = jax.nn.softmax(a2_ref @ xw_ref, axis=1)

    assert out.shape == (num_nodes, out_dim)
    assert jnp.allclose(out, ref, atol=1e-2, rtol=1e-2), float(jnp.max(jnp.abs(out - ref)))

    print("KERNEL_OK")
</pallas_src>

<mosaic_0001>
module attributes {stable_mosaic.version = 11 : i64} {
  func.func @_matmul_act_kernel(%arg0: i32, %arg1: i32, %arg2: memref<16x128xbf16, #tpu.memory_space<vmem>>, %arg3: memref<128x128xbf16, #tpu.memory_space<vmem>>, %arg4: memref<16x128xbf16, #tpu.memory_space<vmem>>, %arg5: memref<16x128xf32, #tpu.memory_space<vmem>>) attributes {dimension_semantics = [#tpu.dimension_semantics<parallel>, #tpu.dimension_semantics<arbitrary>], iteration_bounds = array<i64: 1, 1>, scalar_prefetch = 0 : i64, scratch_operands = 1 : i64, tpu.core_type = #tpu.core_type<tc>, window_params = [{transform_indices = @transform_0, window_bounds = array<i64: 16, 128>}, {transform_indices = @transform_1, window_bounds = array<i64: 128, 128>}, {transform_indices = @transform_2, window_bounds = array<i64: 16, 128>}]} {
    %c0_i32 = arith.constant 0 : i32
    %0 = arith.cmpi eq, %arg1, %c0_i32 : i32
    %1 = arith.extui %0 : i1 to i32
    %c0_i32_0 = arith.constant 0 : i32
    %2 = arith.cmpi ne, %1, %c0_i32_0 : i32
    scf.if %2 {
      %cst_10 = arith.constant 0.000000e+00 : f32
      %12 = vector.broadcast %cst_10 : f32 to vector<16x128xf32>
      %c0_11 = arith.constant 0 : index
      %c0_12 = arith.constant 0 : index
      %13 = vector.load %arg5[%c0_11, %c0_12] : memref<16x128xf32, #tpu.memory_space<vmem>>, vector<16x128xf32>
      tpu.vector_store %arg5[%c0_11, %c0_12], %12 {strides = array<i32>} : memref<16x128xf32, #tpu.memory_space<vmem>>, vector<16x128xf32>,
    } else {
    }
    %c0 = arith.constant 0 : index
    %c0_1 = arith.constant 0 : index
    %3 = vector.load %arg5[%c0, %c0_1] : memref<16x128xf32, #tpu.memory_space<vmem>>, vector<16x128xf32>
    %c0_2 = arith.constant 0 : index
    %c0_3 = arith.constant 0 : index
    %4 = vector.load %arg2[%c0_2, %c0_3] : memref<16x128xbf16, #tpu.memory_space<vmem>>, vector<16x128xbf16>
    %c0_4 = arith.constant 0 : index
    %c0_5 = arith.constant 0 : index
    %5 = vector.load %arg3[%c0_4, %c0_5] : memref<128x128xbf16, #tpu.memory_space<vmem>>, vector<128x128xbf16>
    %cst = arith.constant dense<0.000000e+00> : vector<16x128xf32>
    %6 = tpu.matmul %4, %5, %cst {dimension_numbers = #tpu.dot_dimension_numbers<[1], [0], [0], [1], [0, 0, 1, 1], [], []>} : vector<16x128xbf16>, vector<128x128xbf16>, vector<16x128xf32> -> vector<16x128xf32>
    %7 = arith.addf %3, %6 : vector<16x128xf32>
    %c0_6 = arith.constant 0 : index
    %c0_7 = arith.constant 0 : index
    %8 = vector.load %arg5[%c0_6, %c0_7] : memref<16x128xf32, #tpu.memory_space<vmem>>, vector<16x128xf32>
    tpu.vector_store %arg5[%c0_6, %c0_7], %7 {strides = array<i32>} : memref<16x128xf32, #tpu.memory_space<vmem>>, vector<16x128xf32>,
    %c0_i32_8 = arith.constant 0 : i32
    %9 = arith.cmpi eq, %arg1, %c0_i32_8 : i32
    %10 = arith.extui %9 : i1 to i32
    %c0_i32_9 = arith.constant 0 : i32
    %11 = arith.cmpi ne, %10, %c0_i32_9 : i32
    scf.if %11 {
      %c0_10 = arith.constant 0 : index
      %c0_11 = arith.constant 0 : index
      %12 = vector.load %arg5[%c0_10, %c0_11] : memref<16x128xf32, #tpu.memory_space<vmem>>, vector<16x128xf32>
      %cst_12 = arith.constant 0.000000e+00 : f32
      %13 = vector.broadcast %cst_12 : f32 to vector<16x128xf32>
      %14 = arith.maximumf %12, %13 : vector<16x128xf32>
      %15 = arith.truncf %14 : vector<16x128xf32> to vector<16x128xbf16>
      %c0_13 = arith.constant 0 : index
      %c0_14 = arith.constant 0 : index
      %16 = vector.load %arg4[%c0_13, %c0_14] : memref<16x128xbf16, #tpu.memory_space<vmem>>, vector<16x128xbf16>
      tpu.vector_store %arg4[%c0_13, %c0_14], %15 {strides = array<i32>} : memref<16x128xbf16, #tpu.memory_space<vmem>>, vector<16x128xbf16>,
    } else {
    }
    return
  }
  func.func @transform_0(%arg0: i32, %arg1: i32) -> (i32, i32) {
    %c0_i32 = arith.constant 0 : i32
    return %arg0, %arg1 : i32, i32
  }
  func.func @transform_1(%arg0: i32, %arg1: i32) -> (i32, i32) {
    %c0_i32 = arith.constant 0 : i32
    %c0_i32_0 = arith.constant 0 : i32
    return %arg1, %c0_i32 : i32, i32
  }
  func.func @transform_2(%arg0: i32, %arg1: i32) -> (i32, i32) {
    %c0_i32 = arith.constant 0 : i32
    %c0_i32_0 = arith.constant 0 : i32
    return %arg0, %c0_i32 : i32, i32
  }
}

module attributes {stable_mosaic.version = 11 : i64} {
  func.func @_matmul_act_kernel(%arg0: i32, %arg1: i32, %arg2: memref<16x128xbf16, #tpu.memory_space<vmem>>, %arg3: memref<128x128xbf16, #tpu.memory_space<vmem>>, %arg4: memref<16x128xf32, #tpu.memory_space<vmem>>, %arg5: memref<16x128xf32, #tpu.memory_space<vmem>>) attributes {dimension_semantics = [#tpu.dimension_semantics<parallel>, #tpu.dimension_semantics<arbitrary>], iteration_bounds = array<i64: 1, 1>, scalar_prefetch = 0 : i64, scratch_operands = 1 : i64, tpu.core_type = #tpu.core_type<tc>, window_params = [{transform_indices = @transform_0, window_bounds = array<i64: 16, 128>}, {transform_indices = @transform_1, window_bounds = array<i64: 128, 128>}, {transform_indices = @transform_2, window_bounds = array<i64: 16, 128>}]} {
    %c0_i32 = arith.constant 0 : i32
    %0 = arith.cmpi eq, %arg1, %c0_i32 : i32
    %1 = arith.extui %0 : i1 to i32
    %c0_i32_0 = arith.constant 0 : i32
    %2 = arith.cmpi ne, %1, %c0_i32_0 : i32
    scf.if %2 {
      %cst_10 = arith.constant 0.000000e+00 : f32
      %12 = vector.broadcast %cst_10 : f32 to vector<16x128xf32>
      %c0_11 = arith.constant 0 : index
      %c0_12 = arith.constant 0 : index
      %13 = vector.load %arg5[%c0_11, %c0_12] : memref<16x128xf32, #tpu.memory_space<vmem>>, vector<16x128xf32>
      tpu.vector_store %arg5[%c0_11, %c0_12], %12 {strides = array<i32>} : memref<16x128xf32, #tpu.memory_space<vmem>>, vector<16x128xf32>,
    } else {
    }
    %c0 = arith.constant 0 : index
    %c0_1 = arith.constant 0 : index
    %3 = vector.load %arg5[%c0, %c0_1] : memref<16x128xf32, #tpu.memory_space<vmem>>, vector<16x128xf32>
    %c0_2 = arith.constant 0 : index
    %c0_3 = arith.constant 0 : index
    %4 = vector.load %arg2[%c0_2, %c0_3] : memref<16x128xbf16, #tpu.memory_space<vmem>>, vector<16x128xbf16>
    %c0_4 = arith.constant 0 : index
    %c0_5 = arith.constant 0 : index
    %5 = vector.load %arg3[%c0_4, %c0_5] : memref<128x128xbf16, #tpu.memory_space<vmem>>, vector<128x128xbf16>
    %cst = arith.constant dense<0.000000e+00> : vector<16x128xf32>
    %6 = tpu.matmul %4, %5, %cst {dimension_numbers = #tpu.dot_dimension_numbers<[1], [0], [0], [1], [0, 0, 1, 1], [], []>} : vector<16x128xbf16>, vector<128x128xbf16>, vector<16x128xf32> -> vector<16x128xf32>
    %7 = arith.addf %3, %6 : vector<16x128xf32>
    %c0_6 = arith.constant 0 : index
    %c0_7 = arith.constant 0 : index
    %8 = vector.load %arg5[%c0_6, %c0_7] : memref<16x128xf32, #tpu.memory_space<vmem>>, vector<16x128xf32>
    tpu.vector_store %arg5[%c0_6, %c0_7], %7 {strides = array<i32>} : memref<16x128xf32, #tpu.memory_space<vmem>>, vector<16x128xf32>,
    %c0_i32_8 = arith.constant 0 : i32
    %9 = arith.cmpi eq, %arg1, %c0_i32_8 : i32
    %10 = arith.extui %9 : i1 to i32
    %c0_i32_9 = arith.constant 0 : i32
    %11 = arith.cmpi ne, %10, %c0_i32_9 : i32
    scf.if %11 {
      %c0_10 = arith.constant 0 : index
      %c0_11 = arith.constant 0 : index
      %12 = vector.load %arg5[%c0_10, %c0_11] : memref<16x128xf32, #tpu.memory_space<vmem>>, vector<16x128xf32>
      %13 = tpu.iota {dimensions = array<i32: 1>} : vector<16x128xi32>
      %c8_i32 = arith.constant 8 : i32
      %14 = vector.broadcast %c8_i32 : i32 to vector<16x128xi32>
      %15 = arith.cmpi slt, %13, %14 : vector<16x128xi32>
      %cst_12 = arith.constant -1.000000e+30 : f32
      %16 = vector.broadcast %cst_12 : f32 to vector<16x128xf32>
      %17 = arith.select %15, %12, %16 : vector<16x128xi1>, vector<16x128xf32>
      %cst_13 = arith.constant dense<0xFF800000> : vector<16xf32>
      %18 = vector.multi_reduction <maximumf>, %17, %cst_13 [1] : vector<16x128xf32> to vector<16xf32>
      %19 = vector.shape_cast %18 : vector<16xf32> to vector<16x1xf32>
      %20 = vector.broadcast %19 : vector<16x1xf32> to vector<16x128xf32>
      %21 = arith.subf %17, %20 : vector<16x128xf32>
      %22 = math.exp %21 : vector<16x128xf32>
      %cst_14 = arith.constant dense<0.000000e+00> : vector<16xf32>
      %23 = vector.multi_reduction <add>, %22, %cst_14 [1] : vector<16x128xf32> to vector<16xf32>
      %24 = vector.shape_cast %23 : vector<16xf32> to vector<16x1xf32>
      %25 = tpu.reciprocal %24 {approx = true} : vector<16x1xf32> -> vector<16x1xf32>
      %26 = vector.broadcast %25 : vector<16x1xf32> to vector<16x128xf32>
      %27 = arith.mulf %22, %26 : vector<16x128xf32>
      %c0_15 = arith.constant 0 : index
      %c0_16 = arith.constant 0 : index
      %28 = vector.load %arg4[%c0_15, %c0_16] : memref<16x128xf32, #tpu.memory_space<vmem>>, vector<16x128xf32>
      tpu.vector_store %arg4[%c0_15, %c0_16], %27 {strides = array<i32>} : memref<16x128xf32, #tpu.memory_space<vmem>>, vector<16x128xf32>,
    } else {
    }
    return
  }
  func.func @transform_0(%arg0: i32, %arg1: i32) -> (i32, i32) {
    %c0_i32 = arith.constant 0 : i32
    return %arg0, %arg1 : i32, i32
  }
  func.func @transform_1(%arg0: i32, %arg1: i32) -> (i32, i32) {
    %c0_i32 = arith.constant 0 : i32
    %c0_i32_0 = arith.constant 0 : i32
    return %arg1, %c0_i32 : i32, i32
  }
  func.func @transform_2(%arg0: i32, %arg1: i32) -> (i32, i32) {
    %c0_i32 = arith.constant 0 : i32
    %c0_i32_0 = arith.constant 0 : i32
    return %arg0, %c0_i32 : i32, i32
  }
}

</mosaic_0001>

<llo_original>
// kernel: rgcn_forward.3
$region0: #{rgcn_forward.3}
  #allocation0 [shape = 'u32[]', space=smem, size = 0x4, offset = 0x4, fixed_abs, tag = 'smem constant byte address 0x4 - core index']
  #allocation1 [shape = 'u32[144,128]{1,0:T(1,128)}', space=vmem, size = 0x12000, scoped, tag = 'internal scratch']
  #allocation2 [shape = 'f32[16,128]{1,0:T(8,128)}', space=vmem, size = 0x2000, scoped, tag = 'scratch operand']
  %s0 = inlined_call_operand.vmem [shape: bf16[16,128], index: 0, kind: input, shape index: {}]
  %s1 = inlined_call_operand.vmem [shape: bf16[128,128], index: 1, kind: input, shape index: {}]
  %s2 = inlined_call_operand.vmem [shape: bf16[16,128], index: 2, kind: output, shape index: {}]
  %s3 = sld [smem:[#allocation0]]
  $region26: #{rgcn_forward.3} parent=0
    _
  %s5 = ssub.s32 1, %s3
  %s6 = scalar_select 0, %s5, %s3
  // Predicated region
  $region2: #{rgcn_forward.3} parent=0 // pred_check
    _
  $region3: #{rgcn_forward.3} parent=0 // pred_check_branch
    %8 = sbr.rel (0) target = $region5
  $region4: #{rgcn_forward.3} parent=0 // pred_region
    _
  $region5: #{rgcn_forward.3} parent=0 // pred_fallthru
    _
  // Predicated region
  $region6: #{rgcn_forward.3} parent=0 // pred_check
    _
  $region7: #{rgcn_forward.3} parent=0 // pred_check_branch
    %10 = sbr.rel (0) target = $region9
  $region8: #{rgcn_forward.3} parent=0 // pred_region
    _
  $region9: #{rgcn_forward.3} parent=0 // pred_fallthru
    _
  %p12 = scmp.eq.s32.totalorder 0, 0
  // Predicated region
  $region10: #{rgcn_forward.3} parent=0 // pred_check
    %p13 = pneg %p12
  $region11: #{rgcn_forward.3} parent=0 // pred_check_branch
    %15 = sbr.rel (%p13) target = $region13
  $region12: #{rgcn_forward.3} parent=0 // pred_region
    %16 = vst [vmem:[#allocation2] sm:$0xff] 0.0
    %17 = vst [vmem:[#allocation2 + $0x8] sm:$0xff] 0.0
  $region13: #{rgcn_forward.3} parent=0 // pred_fallthru
    _
  %v18 = vld [vmem:[#allocation2] sm:$0xff]
  %v19 = vld [vmem:[#allocation2 + $0x8] sm:$0xff]
  %v20 = vld [vmem:[%s0] sm:$0xf]
  %v21 = vld [vmem:[%s0 + $0x4] sm:$0xf]
  %v22 = vld [vmem:[%s1] sm:$0xf]
  %v23 = vld [vmem:[%s1 + $0x4] sm:$0xf]
  %v24 = vld [vmem:[%s1 + $0x8] sm:$0xf]
  %v25 = vld [vmem:[%s1 + $0xc] sm:$0xf]
  %v26 = vld [vmem:[%s1 + $0x10] sm:$0xf]
  %v27 = vld [vmem:[%s1 + $0x14] sm:$0xf]
  %v28 = vld [vmem:[%s1 + $0x18] sm:$0xf]
  %v29 = vld [vmem:[%s1 + $0x1c] sm:$0xf]
  %v30 = vld [vmem:[%s1 + $0x20] sm:$0xf]
  %v31 = vld [vmem:[%s1 + $0x24] sm:$0xf]
  %v32 = vld [vmem:[%s1 + $0x28] sm:$0xf]
  %v33 = vld [vmem:[%s1 + $0x2c] sm:$0xf]
  %v34 = vld [vmem:[%s1 + $0x30] sm:$0xf]
  %v35 = vld [vmem:[%s1 + $0x34] sm:$0xf]
  %v36 = vld [vmem:[%s1 + $0x38] sm:$0xf]
  %v37 = vld [vmem:[%s1 + $0x3c] sm:$0xf]
  %v40 = vunpack.c.l.b16 %v20
  %v41 = vunpack.c.l.b16 %v21
  %v42 = vpack.c.b16 %v41, %v40
  %v60 = vunpack.c.l.b16 %v22
  %v61 = vunpack.c.l.b16 %v23
  %v62 = vunpack.c.l.b16 %v24
  %v63 = vunpack.c.l.b16 %v25
  %v64 = vunpack.c.l.b16 %v26
  %v65 = vunpack.c.l.b16 %v27
  %v66 = vunpack.c.l.b16 %v28
  %v67 = vunpack.c.l.b16 %v29
  %v68 = vunpack.c.l.b16 %v30
  %v69 = vunpack.c.l.b16 %v31
  %v70 = vunpack.c.l.b16 %v32
  %v71 = vunpack.c.l.b16 %v33
  %v72 = vunpack.c.l.b16 %v34
  %v73 = vunpack.c.l.b16 %v35
  %v74 = vunpack.c.l.b16 %v36
  %v75 = vunpack.c.l.b16 %v37
  %v76 = vpack.c.b16 %v61, %v60
  %v77 = vpack.c.b16 %v63, %v62
  %v78 = vpack.c.b16 %v65, %v64
  %v79 = vpack.c.b16 %v67, %v66
  %v80 = vpack.c.b16 %v69, %v68
  %v81 = vpack.c.b16 %v71, %v70
  %v82 = vpack.c.b16 %v73, %v72
  %v83 = vpack.c.b16 %v75, %v74
  %92 = vmatprep.subr.bf16.mxu0 0
  %93 = vmatpush1.bf16.msra.mxu0 %v76
  %94 = vmatprep.subr.bf16.mxu0 0
  %95 = vmatpush1.bf16.msra.mxu0 %v77
  %96 = vmatprep.subr.bf16.mxu0 0
  %97 = vmatpush1.bf16.msra.mxu0 %v78
  %98 = vmatprep.subr.bf16.mxu0 0
  %99 = vmatpush1.bf16.msra.mxu0 %v79
  %100 = vmatprep.subr.bf16.mxu0 0
  %101 = vmatpush1.bf16.msra.mxu0 %v80
  %102 = vmatprep.subr.bf16.mxu0 0
  %103 = vmatpush1.bf16.msra.mxu0 %v81
  %104 = vmatprep.subr.bf16.mxu0 0
  %105 = vmatpush1.bf16.msra.mxu0 %v82
  %106 = vmatprep.subr.bf16.mxu0 0
  %107 = vmatpush1.bf16.msra.mxu0 %v83
  %108 = vmatprep.subr.bf16.mxu0 0
  %109 = vmatpush1.bf16.msra.mxu0 0
  %110 = vmatprep.subr.bf16.mxu0 0
  %111 = vmatpush1.bf16.msra.mxu0 0
  %112 = vmatprep.subr.bf16.mxu0 0
  %113 = vmatpush1.bf16.msra.mxu0 0
  %114 = vmatprep.subr.bf16.mxu0 0
  %115 = vmatpush1.bf16.msra.mxu0 0
  %116 = vmatprep.subr.bf16.mxu0 0
  %117 = vmatpush1.bf16.msra.mxu0 0
  %118 = vmatprep.subr.bf16.mxu0 0
  %119 = vmatpush1.bf16.msra.mxu0 0
  %120 = vmatprep.subr.bf16.mxu0 0
  %121 = vmatpush1.bf16.msra.mxu0 0
  %122 = vmatprep.subr.bf16.mxu0 0
  %123 = vmatpush1.bf16.msra.mxu0 0
  %124 = vmatprep.mubr.bf16.mxu0 0
  %125 = vmatmul.mubr.bf16.gmra.mrb[0].mxu0 %v42
  %v126 = vpop.f32.mrb[0].mxu0
  %v127 = vadd.f32 0.0, %v126
  %v128 = vpop.f32.mrb[0].mxu0
  %v129 = vpop.f32.mrb[0].mxu0
  %v130 = vadd.f32 0.0, %v129
  %v131 = vpop.f32.mrb[0].mxu0
  %132 = vdwg.mxu0
  %v133 = vadd.f32 %v18, %v127
  %v134 = vadd.f32 %v19, %v130
  %135 = vst [vmem:[#allocation2] sm:$0xff] %v133
  %136 = vst [vmem:[#allocation2 + $0x8] sm:$0xff] %v134
  // Predicated region
  $region14: #{rgcn_forward.3} parent=0 // pred_check
    %p137 = pneg %p12
  $region15: #{rgcn_forward.3} parent=0 // pred_check_branch
    %139 = sbr.rel (%p137) target = $region17
  $region16: #{rgcn_forward.3} parent=0 // pred_region
    %v140 = vld [vmem:[#allocation2] sm:$0xff]
    %v141 = vld [vmem:[#allocation2 + $0x8] sm:$0xff]
    %v142 = vmax.f32 %v140, 0.0
    %v143 = vmax.f32 %v141, 0.0
    %v144 = vpack.c.bf16 %v143, %v142
    %145 = vst [vmem:[%s2] sm:$0xff] %v144
  $region17: #{rgcn_forward.3} parent=0 // pred_fallthru
    _
  // Predicated region
  $region18: #{rgcn_forward.3} parent=0 // pred_check
    _
  $region19: #{rgcn_forward.3} parent=0 // pred_check_branch
    %147 = sbr.rel (0) target = $region21
  $region20: #{rgcn_forward.3} parent=0 // pred_region
    _
  $region21: #{rgcn_forward.3} parent=0 // pred_fallthru
    _
  // Predicated region
  $region22: #{rgcn_forward.3} parent=0 // pred_check
    _
  $region23: #{rgcn_forward.3} parent=0 // pred_check_branch
    %149 = sbr.rel (0) target = $region25
  $region24: #{rgcn_forward.3} parent=0 // pred_region
    _
  $region25: #{rgcn_forward.3} parent=0 // pred_fallthru
    _

// kernel: rgcn_forward.5
$region0: #{rgcn_forward.5}
  #allocation0 [shape = 'u32[]', space=smem, size = 0x4, offset = 0x4, fixed_abs, tag = 'smem constant byte address 0x4 - core index']
  #allocation1 [shape = 'u32[144,128]{1,0:T(1,128)}', space=vmem, size = 0x12000, scoped, tag = 'internal scratch']
  #allocation2 [shape = 'f32[16,128]{1,0:T(8,128)}', space=vmem, size = 0x2000, scoped, tag = 'scratch operand']
  %s0 = inlined_call_operand.vmem [shape: bf16[16,128], index: 0, kind: input, shape index: {}]
  %s1 = inlined_call_operand.vmem [shape: bf16[128,128], index: 1, kind: input, shape index: {}]
  %s2 = inlined_call_operand.vmem [shape: f32[16,128], index: 2, kind: output, shape index: {}]
  %s3 = sld [smem:[#allocation0]]
  $region26: #{rgcn_forward.5} parent=0
    _
  %s5 = ssub.s32 1, %s3
  %s6 = scalar_select 0, %s5, %s3
  // Predicated region
  $region2: #{rgcn_forward.5} parent=0 // pred_check
    _
  $region3: #{rgcn_forward.5} parent=0 // pred_check_branch
    %8 = sbr.rel (0) target = $region5
  $region4: #{rgcn_forward.5} parent=0 // pred_region
    _
  $region5: #{rgcn_forward.5} parent=0 // pred_fallthru
    _
  // Predicated region
  $region6: #{rgcn_forward.5} parent=0 // pred_check
    _
  $region7: #{rgcn_forward.5} parent=0 // pred_check_branch
    %10 = sbr.rel (0) target = $region9
  $region8: #{rgcn_forward.5} parent=0 // pred_region
    _
  $region9: #{rgcn_forward.5} parent=0 // pred_fallthru
    _
  %p12 = scmp.eq.s32.totalorder 0, 0
  // Predicated region
  $region10: #{rgcn_forward.5} parent=0 // pred_check
    %p13 = pneg %p12
  $region11: #{rgcn_forward.5} parent=0 // pred_check_branch
    %15 = sbr.rel (%p13) target = $region13
  $region12: #{rgcn_forward.5} parent=0 // pred_region
    %16 = vst [vmem:[#allocation2] sm:$0xff] 0.0
    %17 = vst [vmem:[#allocation2 + $0x8] sm:$0xff] 0.0
  $region13: #{rgcn_forward.5} parent=0 // pred_fallthru
    _
  %v18 = vld [vmem:[#allocation2] sm:$0xff]
  %v19 = vld [vmem:[#allocation2 + $0x8] sm:$0xff]
  %v20 = vld [vmem:[%s0] sm:$0xf]
  %v21 = vld [vmem:[%s0 + $0x4] sm:$0xf]
  %v22 = vld [vmem:[%s1] sm:$0xf]
  %v23 = vld [vmem:[%s1 + $0x4] sm:$0xf]
  %v24 = vld [vmem:[%s1 + $0x8] sm:$0xf]
  %v25 = vld [vmem:[%s1 + $0xc] sm:$0xf]
  %v26 = vld [vmem:[%s1 + $0x10] sm:$0xf]
  %v27 = vld [vmem:[%s1 + $0x14] sm:$0xf]
  %v28 = vld [vmem:[%s1 + $0x18] sm:$0xf]
  %v29 = vld [vmem:[%s1 + $0x1c] sm:$0xf]
  %v30 = vld [vmem:[%s1 + $0x20] sm:$0xf]
  %v31 = vld [vmem:[%s1 + $0x24] sm:$0xf]
  %v32 = vld [vmem:[%s1 + $0x28] sm:$0xf]
  %v33 = vld [vmem:[%s1 + $0x2c] sm:$0xf]
  %v34 = vld [vmem:[%s1 + $0x30] sm:$0xf]
  %v35 = vld [vmem:[%s1 + $0x34] sm:$0xf]
  %v36 = vld [vmem:[%s1 + $0x38] sm:$0xf]
  %v37 = vld [vmem:[%s1 + $0x3c] sm:$0xf]
  %v40 = vunpack.c.l.b16 %v20
  %v41 = vunpack.c.l.b16 %v21
  %v42 = vpack.c.b16 %v41, %v40
  %v60 = vunpack.c.l.b16 %v22
  %v61 = vunpack.c.l.b16 %v23
  %v62 = vunpack.c.l.b16 %v24
  %v63 = vunpack.c.l.b16 %v25
  %v64 = vunpack.c.l.b16 %v26
  %v65 = vunpack.c.l.b16 %v27
  %v66 = vunpack.c.l.b16 %v28
  %v67 = vunpack.c.l.b16 %v29
  %v68 = vunpack.c.l.b16 %v30
  %v69 = vunpack.c.l.b16 %v31
  %v70 = vunpack.c.l.b16 %v32
  %v71 = vunpack.c.l.b16 %v33
  %v72 = vunpack.c.l.b16 %v34
  %v73 = vunpack.c.l.b16 %v35
  %v74 = vunpack.c.l.b16 %v36
  %v75 = vunpack.c.l.b16 %v37
  %v76 = vpack.c.b16 %v61, %v60
  %v77 = vpack.c.b16 %v63, %v62
  %v78 = vpack.c.b16 %v65, %v64
  %v79 = vpack.c.b16 %v67, %v66
  %v80 = vpack.c.b16 %v69, %v68
  %v81 = vpack.c.b16 %v71, %v70
  %v82 = vpack.c.b16 %v73, %v72
  %v83 = vpack.c.b16 %v75, %v74
  %92 = vmatprep.subr.bf16.mxu0 0
  %93 = vmatpush1.bf16.msra.mxu0 %v76
  %94 = vmatprep.subr.bf16.mxu0 0
  %95 = vmatpush1.bf16.msra.mxu0 %v77
  %96 = vmatprep.subr.bf16.mxu0 0
  %97 = vmatpush1.bf16.msra.mxu0 %v78
  %98 = vmatprep.subr.bf16.mxu0 0
  %99 = vmatpush1.bf16.msra.mxu0 %v79
  %100 = vmatprep.subr.bf16.mxu0 0
  %101 = vmatpush1.bf16.msra.mxu0 %v80
  %102 = vmatprep.subr.bf16.mxu0 0
  %103 = vmatpush1.bf16.msra.mxu0 %v81
  %104 = vmatprep.subr.bf16.mxu0 0
  %105 = vmatpush1.bf16.msra.mxu0 %v82
  %106 = vmatprep.subr.bf16.mxu0 0
  %107 = vmatpush1.bf16.msra.mxu0 %v83
  %108 = vmatprep.subr.bf16.mxu0 0
  %109 = vmatpush1.bf16.msra.mxu0 0
  %110 = vmatprep.subr.bf16.mxu0 0
  %111 = vmatpush1.bf16.msra.mxu0 0
  %112 = vmatprep.subr.bf16.mxu0 0
  %113 = vmatpush1.bf16.msra.mxu0 0
  %114 = vmatprep.subr.bf16.mxu0 0
  %115 = vmatpush1.bf16.msra.mxu0 0
  %116 = vmatprep.subr.bf16.mxu0 0
  %117 = vmatpush1.bf16.msra.mxu0 0
  %118 = vmatprep.subr.bf16.mxu0 0
  %119 = vmatpush1.bf16.msra.mxu0 0
  %120 = vmatprep.subr.bf16.mxu0 0
  %121 = vmatpush1.bf16.msra.mxu0 0
  %122 = vmatprep.subr.bf16.mxu0 0
  %123 = vmatpush1.bf16.msra.mxu0 0
  %124 = vmatprep.mubr.bf16.mxu0 0
  %125 = vmatmul.mubr.bf16.gmra.mrb[0].mxu0 %v42
  %v126 = vpop.f32.mrb[0].mxu0
  %v127 = vadd.f32 0.0, %v126
  %v128 = vpop.f32.mrb[0].mxu0
  %v129 = vpop.f32.mrb[0].mxu0
  %v130 = vadd.f32 0.0, %v129
  %v131 = vpop.f32.mrb[0].mxu0
  %132 = vdwg.mxu0
  %v133 = vadd.f32 %v18, %v127
  %v134 = vadd.f32 %v19, %v130
  %135 = vst [vmem:[#allocation2] sm:$0xff] %v133
  %136 = vst [vmem:[#allocation2 + $0x8] sm:$0xff] %v134
  // Predicated region
  $region14: #{rgcn_forward.5} parent=0 // pred_check
    %p137 = pneg %p12
  $region15: #{rgcn_forward.5} parent=0 // pred_check_branch
    %139 = sbr.rel (%p137) target = $region17
  $region16: #{rgcn_forward.5} parent=0 // pred_region
    %v140 = vld [vmem:[#allocation2] sm:$0xff]
    %v141 = vld [vmem:[#allocation2 + $0x8] sm:$0xff]
    %v142 = vlaneseq
    %v143 = vand.u32 %v142, 127
    %vm144 = vcmp.lt.s32.totalorder %v143, 8
    %v145 = vsel %vm144, %v140, -1e+30
    %v146 = vsel %vm144, %v141, -1e+30
    %147 = vmax.xlane.f32.xlu0 %v145
    %v148 = vpop.xlane.xlu0 %147
    %149 = vmax.xlane.f32.xlu0 %v146
    %v150 = vpop.xlane.xlu0 %149
    %v151 = vsub.f32 %v145, %v148
    %v152 = vsub.f32 %v146, %v150
    %v153 = vmul.f32 %v151, 1.442695
    %v154 = vpow.pop %v153
    %v155 = vmul.f32 %v152, 1.442695
    %v156 = vpow.pop %v155
    %157 = vadd.xlane.f32.xlu0 %v154
    %v158 = vpop.xlane.xlu0 %157
    %159 = vadd.xlane.f32.xlu0 %v156
    %v160 = vpop.xlane.xlu0 %159
    %v161 = vrcp.pop %v158
    %v162 = vrcp.pop %v160
    %v163 = vmul.f32 %v154, %v161
    %v164 = vmul.f32 %v156, %v162
    %165 = vst [vmem:[%s2] sm:$0xff] %v163
    %166 = vst [vmem:[%s2 + $0x8] sm:$0xff] %v164
  $region17: #{rgcn_forward.5} parent=0 // pred_fallthru
    _
  // Predicated region
  $region18: #{rgcn_forward.5} parent=0 // pred_check
    _
  $region19: #{rgcn_forward.5} parent=0 // pred_check_branch
    %168 = sbr.rel (0) target = $region21
  $region20: #{rgcn_forward.5} parent=0 // pred_region
    _
  $region21: #{rgcn_forward.5} parent=0 // pred_fallthru
    _
  // Predicated region
  $region22: #{rgcn_forward.5} parent=0 // pred_check
    _
  $region23: #{rgcn_forward.5} parent=0 // pred_check_branch
    %170 = sbr.rel (0) target = $region25
  $region24: #{rgcn_forward.5} parent=0 // pred_region
    _
  $region25: #{rgcn_forward.5} parent=0 // pred_fallthru
    _

</llo_original>
